<compile_context>
chip_gen: v6e
topology: v6e:2x2x1
jax: 0.10.0
libtpu: 0.0.40
codegen_flags: <defaults>
</compile_context>

<pallas_src>
import functools

import jax
import jax.numpy as jnp
from jax.experimental import pallas as pl
from jax.experimental.pallas import tpu as pltpu

_VMEM_FRACTION = 0.75
_EXACT_SOFTMAX = False  # set True for bit-accurate validation (exact divide, no EUP approx)


# ----------------------------------------------------------------------------
# Helpers
# ----------------------------------------------------------------------------

@functools.lru_cache(maxsize=None)
def _vmem_limit_bytes():
    """~75% of the physical per-core VMEM (generation aware, v7x = 64 MiB)."""
    cap = 128 * 1024 * 1024
    try:
        cap = int(pltpu.get_tpu_info().vmem_capacity_bytes)
    except Exception:
        pass
    return max(16 * 1024 * 1024, int(cap * _VMEM_FRACTION))


def _pick_tile(dim, target, align):
    """Largest `align`-aligned divisor of `dim` that is <= target (or `dim`)."""
    if dim <= target:
        return dim
    t = (target // align) * align
    while t >= align:
        if dim % t == 0:
            return t
        t -= align
    # NOTE: fallback uses the full dim (can blow the VMEM budget for odd sizes,
    # but keeps the kernel runnable).
    return dim


def _const_spec(shape):
    """Full-array block whose block index never changes across the grid.

    Single-buffered (pl.Buffered(1)): the block is fetched exactly once, so
    double-buffering it would only double its VMEM footprint.
    """
    idx = lambda *args: (0,) * len(shape)
    try:
        return pl.BlockSpec(shape, idx, pipeline_mode=pl.Buffered(1))
    except Exception:  # older jax without pipeline_mode / Buffered(1)
        return pl.BlockSpec(shape, idx)


# ----------------------------------------------------------------------------
# Pallas kernels
# ----------------------------------------------------------------------------

def _qkv_kernel(x_ref, wqkv_ref, bqkv_ref, q_ref, k_ref, v_ref):
    """(1, ts, D) @ (D, 3D) + b -> split into q/k/v (each (1, ts, D))."""
    D = q_ref.shape[2]
    qkv = (jnp.dot(x_ref[0], wqkv_ref[...], preferred_element_type=jnp.float32)
           + bqkv_ref[...])
    q_ref[0] = qkv[:, 0 * D:1 * D].astype(q_ref.dtype)
    k_ref[0] = qkv[:, 1 * D:2 * D].astype(k_ref.dtype)
    v_ref[0] = qkv[:, 2 * D:3 * D].astype(v_ref.dtype)


def _attn_ln1_kernel(x_ref, q_ref, k_ref, v_ref, wo_ref, bo_ref, g1_ref, be1_ref,
                     o_ref, *, num_heads, eps=1e-5):
    """Query-tiled self-attention + output projection + residual + LayerNorm1.

    x_ref/q_ref blocks: (1, tq, D).  k_ref/v_ref blocks: (1, S, D) (all keys).
    Only (H, tq, S) scores are live, never the full (H, S, S).
    """
    tq, D = x_ref.shape[1], x_ref.shape[2]
    S = k_ref.shape[1]
    H = num_heads
    hd = D // H
    scale = 1.0 / (hd ** 0.5)

    q = q_ref[0].reshape(tq, H, hd)
    k = k_ref[0].reshape(S, H, hd)
    v = v_ref[0].reshape(S, H, hd)

    # Batched over heads via dot_general batch dims (no per-head lane slicing).
    s = jnp.einsum('qhd,khd->hqk', q, k,
                   preferred_element_type=jnp.float32) * scale        # (H, tq, S)
    s = s - jnp.max(s, axis=-1, keepdims=True)
    p = jnp.exp(s)
    denom = jnp.sum(p, axis=-1, keepdims=True)
    if _EXACT_SOFTMAX:
        p = p / denom
    else:
        p = p * pl.reciprocal(denom, approx=True)                      # EUP slot
    ctx = jnp.einsum('hqk,khd->hqd', p.astype(v.dtype), v,
                     preferred_element_type=jnp.float32)               # (H, tq, hd)

    # Fold the head-concat so the output projection is a single K=D MXU matmul
    # (instead of H accumulated K=hd matmuls).
    ctx2 = jnp.concatenate([ctx[h] for h in range(H)], axis=-1)        # (tq, D)
    attn = (jnp.dot(ctx2.astype(wo_ref.dtype), wo_ref[...],
                    preferred_element_type=jnp.float32) + bo_ref[...])

    # residual + LayerNorm1 (norm_first=False, PyTorch default); dropout == identity.
    h1 = x_ref[0].astype(jnp.float32) + attn
    mu = jnp.mean(h1, axis=-1, keepdims=True)
    var = jnp.mean((h1 - mu) ** 2, axis=-1, keepdims=True)
    h1 = (h1 - mu) * jax.lax.rsqrt(var + eps) * g1_ref[...] + be1_ref[...]
    o_ref[0] = h1.astype(o_ref.dtype)


def _ffn_ln2_kernel(h1_ref, w1_ref, bf1_ref, w2_ref, bf2_ref, g2_ref, be2_ref,
                    o_ref, acc_ref, *, eps=1e-5):
    """FFN with the hidden dim as a grid reduction axis, then residual + LayerNorm2.

    Grid = (B, S/ts, HID/tf); w1 column-tiles (D, tf) and w2 row-tiles (tf, D) are
    streamed; acc_ref (ts, D) f32 accumulates the FFN output across tiles.
    """
    f = pl.program_id(2)

    @pl.when(f == 0)
    def _():
        acc_ref[...] = jnp.zeros_like(acc_ref)

    h1 = h1_ref[0]                                                     # (ts, D) bf16
    a = (jnp.dot(h1, w1_ref[...], preferred_element_type=jnp.float32)
         + bf1_ref[...])
    a = jnp.maximum(a, 0.0).astype(w2_ref.dtype)                       # ReLU, fused
    acc_ref[...] += jnp.dot(a, w2_ref[...], preferred_element_type=jnp.float32)

    @pl.when(f == pl.num_programs(2) - 1)
    def _():
        # residual + LayerNorm2; dropout == identity (eval).
        h2 = h1_ref[0].astype(jnp.float32) + acc_ref[...] + bf2_ref[...]
        mu = jnp.mean(h2, axis=-1, keepdims=True)
        var = jnp.mean((h2 - mu) ** 2, axis=-1, keepdims=True)
        o_ref[0] = ((h2 - mu) * jax.lax.rsqrt(var + eps) * g2_ref[...]
                    + be2_ref[...]).astype(o_ref.dtype)


def _lm_head_kernel(x_ref, w_ref, b_ref, o_ref):
    """Tiled LM head: (1, ts, D) @ (D, tn) + (1, tn) -> (1, ts, tn) f32 logits."""
    o_ref[0] = (jnp.dot(x_ref[0], w_ref[...], preferred_element_type=jnp.float32)
                + b_ref[...])


# ----------------------------------------------------------------------------
# Wrappers
# ----------------------------------------------------------------------------

def qkv_proj(x, wqkv, bqkv, *, seq_tile_target=256):
    B, S, D = x.shape
    ts = _pick_tile(S, seq_tile_target, 8)
    out = jax.ShapeDtypeStruct((B, S, D), x.dtype)
    return pl.pallas_call(
        _qkv_kernel,
        out_shape=(out, out, out),
        grid=(B, S // ts),
        in_specs=[pl.BlockSpec((1, ts, D), lambda b, i: (b, i, 0)),
                  _const_spec(wqkv.shape),
                  _const_spec(bqkv.shape)],
        out_specs=(pl.BlockSpec((1, ts, D), lambda b, i: (b, i, 0)),
                   pl.BlockSpec((1, ts, D), lambda b, i: (b, i, 0)),
                   pl.BlockSpec((1, ts, D), lambda b, i: (b, i, 0))),
        compiler_params=pltpu.CompilerParams(
            dimension_semantics=("parallel", "parallel"),
            vmem_limit_bytes=_vmem_limit_bytes()),
    )(x, wqkv, bqkv)


def attention_ln1(x, q, k, v, wo, bo, g1, be1, num_heads, *, q_tile_target=256):
    B, S, D = x.shape
    assert D % num_heads == 0, "embed_dim must be divisible by num_heads"
    tq = _pick_tile(S, q_tile_target, 8)
    kernel = functools.partial(_attn_ln1_kernel, num_heads=num_heads)
    return pl.pallas_call(
        kernel,
        out_shape=jax.ShapeDtypeStruct((B, S, D), x.dtype),
        grid=(B, S // tq),
        in_specs=[
            pl.BlockSpec((1, tq, D), lambda b, qi: (b, qi, 0)),   # x  (residual rows)
            pl.BlockSpec((1, tq, D), lambda b, qi: (b, qi, 0)),   # q  (query tile)
            pl.BlockSpec((1, S, D), lambda b, qi: (b, 0, 0)),     # k  (all keys)
            pl.BlockSpec((1, S, D), lambda b, qi: (b, 0, 0)),     # v  (all values)
            _const_spec(wo.shape),
            _const_spec(bo.shape),
            _const_spec(g1.shape),
            _const_spec(be1.shape),
        ],
        out_specs=pl.BlockSpec((1, tq, D), lambda b, qi: (b, qi, 0)),
        compiler_params=pltpu.CompilerParams(
            dimension_semantics=("parallel", "parallel"),
            vmem_limit_bytes=_vmem_limit_bytes()),
    )(x, q, k, v, wo, bo, g1, be1)


def ffn_ln2(h1, w1, bf1, w2, bf2, g2, be2, *, seq_tile_target=512, ffn_tile_target=512):
    B, S, D = h1.shape
    Hdim = w1.shape[1]
    ts = _pick_tile(S, seq_tile_target, 8)
    tf = _pick_tile(Hdim, ffn_tile_target, 128)
    return pl.pallas_call(
        _ffn_ln2_kernel,
        out_shape=jax.ShapeDtypeStruct((B, S, D), h1.dtype),
        grid=(B, S // ts, Hdim // tf),
        in_specs=[
            pl.BlockSpec((1, ts, D), lambda b, i, f: (b, i, 0)),   # h1 (reused across f)
            pl.BlockSpec((D, tf), lambda b, i, f: (0, f)),         # w1 column tile
            pl.BlockSpec((1, tf), lambda b, i, f: (0, f)),         # b1 tile
            pl.BlockSpec((tf, D), lambda b, i, f: (f, 0)),         # w2 row tile
            _const_spec(bf2.shape),
            _const_spec(g2.shape),
            _const_spec(be2.shape),
        ],
        out_specs=pl.BlockSpec((1, ts, D), lambda b, i, f: (b, i, 0)),
        scratch_shapes=[pltpu.VMEM((ts, D), jnp.float32)],
        compiler_params=pltpu.CompilerParams(
            dimension_semantics=("parallel", "parallel", "arbitrary"),
            vmem_limit_bytes=_vmem_limit_bytes()),
    )(h1, w1, bf1, w2, bf2, g2, be2)


def lm_head(x, w, b, *, vocab_tile_target=512, seq_tile_target=512):
    B, S, D = x.shape
    V = w.shape[1]
    tn = _pick_tile(V, vocab_tile_target, 128)   # lane-dense output tiles
    ts = _pick_tile(S, seq_tile_target, 8)
    # Vocab tile OUTER: the large (D, tn) weight tile is constant across the inner
    # (B, S/ts) steps and therefore reused, instead of being re-streamed per seq tile.
    grid = (V // tn, B, S // ts)
    return pl.pallas_call(
        _lm_head_kernel,
        out_shape=jax.ShapeDtypeStruct((B, S, V), jnp.float32),
        grid=grid,
        in_specs=[pl.BlockSpec((1, ts, D), lambda j, b, i: (b, i, 0)),
                  pl.BlockSpec((D, tn), lambda j, b, i: (0, j)),
                  pl.BlockSpec((1, tn), lambda j, b, i: (0, j))],
        out_specs=pl.BlockSpec((1, ts, tn), lambda j, b, i: (b, i, j)),
        compiler_params=pltpu.CompilerParams(
            dimension_semantics=("parallel", "parallel", "parallel"),
            vmem_limit_bytes=_vmem_limit_bytes()),
    )(x, w, b)


# ----------------------------------------------------------------------------
# Parameters + forward
# ----------------------------------------------------------------------------

def init_params(key, vocab_size, embed_dim, hidden_dim, num_layers, seq_length):
    """bf16 weights (MXU peak is bf16), f32 biases / LayerNorm params."""
    std = 0.02
    wdt = jnp.bfloat16
    keys = jax.random.split(key, 3 + num_layers)
    params = {
        "embed": (jax.random.normal(keys[0], (vocab_size, embed_dim)) * std).astype(jnp.float32),
        "pos": (jax.random.normal(keys[1], (seq_length, embed_dim)) * std).astype(jnp.float32),
        "fc_w": (jax.random.normal(keys[2], (embed_dim, vocab_size)) * std).astype(wdt),
        "fc_b": jnp.zeros((1, vocab_size), jnp.float32),
        "layers": [],
    }
    for l in range(num_layers):
        lk = jax.random.split(keys[3 + l], 4)
        layer = {
            "wqkv": (jax.random.normal(lk[0], (embed_dim, 3 * embed_dim)) * std).astype(wdt),
            "bqkv": jnp.zeros((1, 3 * embed_dim), jnp.float32),
            "wo": (jax.random.normal(lk[1], (embed_dim, embed_dim)) * std).astype(wdt),
            "bo": jnp.zeros((1, embed_dim), jnp.float32),
            "g1": jnp.ones((1, embed_dim), jnp.float32),
            "be1": jnp.zeros((1, embed_dim), jnp.float32),
            "w1": (jax.random.normal(lk[2], (embed_dim, hidden_dim)) * std).astype(wdt),
            "bf1": jnp.zeros((1, hidden_dim), jnp.float32),
            "w2": (jax.random.normal(lk[3], (hidden_dim, embed_dim)) * std).astype(wdt),
            "bf2": jnp.zeros((1, embed_dim), jnp.float32),
            "g2": jnp.ones((1, embed_dim), jnp.float32),
            "be2": jnp.zeros((1, embed_dim), jnp.float32),
        }
        params["layers"].append(layer)
    return params


def transformer_lm_forward(tokens, params, num_heads):
    """tokens: (B, S) int32 -> logits: (B, S, vocab) float32."""
    B, S = tokens.shape
    # Embedding lookups (gather) are glue, done in plain JAX.
    x = params["embed"][tokens] + params["pos"][jnp.arange(S)][None, :, :]
    x = x.astype(jnp.bfloat16)        # activations flow in bf16, matmuls accumulate f32
    for layer in params["layers"]:
        q, k, v = qkv_proj(x, layer["wqkv"], layer["bqkv"])
        h1 = attention_ln1(x, q, k, v, layer["wo"], layer["bo"],
                           layer["g1"], layer["be1"], num_heads)
        x = ffn_ln2(h1, layer["w1"], layer["bf1"], layer["w2"], layer["bf2"],
                    layer["g2"], layer["be2"])
    return lm_head(x, params["fc_w"], params["fc_b"])


# ----------------------------------------------------------------------------
# Demo
# ----------------------------------------------------------------------------

if __name__ == "__main__":
    # NOTE: demo head_dim = 8 under-fills MXU/lanes; realistic configs should use
    # head_dim = 128 for best QK^T / PV utilization.
    vocab_size, embed_dim, num_heads, hidden_dim, num_layers, seq_length = 32, 32, 4, 64, 2, 8
    batch = 2

    key = jax.random.PRNGKey(0)
    pkey, tkey = jax.random.split(key)
    params = init_params(pkey, vocab_size, embed_dim, hidden_dim, num_layers, seq_length)
    tokens = jax.random.randint(tkey, (batch, seq_length), 0, vocab_size, dtype=jnp.int32)

    logits = transformer_lm_forward(tokens, params, num_heads)
    jax.block_until_ready(logits)
    assert logits.shape == (batch, seq_length, vocab_size)
    assert logits.dtype == jnp.float32
    assert bool(jnp.all(jnp.isfinite(logits)))
    print("KERNEL_OK")
</pallas_src>

<mosaic_0001>
module attributes {stable_mosaic.version = 11 : i64} {
  func.func @_qkv_kernel(%arg0: i32, %arg1: i32, %arg2: memref<1x8x32xbf16, #tpu.memory_space<vmem>>, %arg3: memref<32x96xbf16, #tpu.memory_space<vmem>>, %arg4: memref<1x96xf32, #tpu.memory_space<vmem>>, %arg5: memref<1x8x32xbf16, #tpu.memory_space<vmem>>, %arg6: memref<1x8x32xbf16, #tpu.memory_space<vmem>>, %arg7: memref<1x8x32xbf16, #tpu.memory_space<vmem>>) attributes {dimension_semantics = [#tpu.dimension_semantics<parallel>, #tpu.dimension_semantics<parallel>], iteration_bounds = array<i64: 2, 1>, scalar_prefetch = 0 : i64, scratch_operands = 0 : i64, tpu.core_type = #tpu.core_type<tc>, window_params = [{transform_indices = @transform_0, window_bounds = array<i64: 1, 8, 32>}, {pipeline_mode = #tpu.pipeline_mode<synchronous>, transform_indices = @transform_1, window_bounds = array<i64: 32, 96>}, {pipeline_mode = #tpu.pipeline_mode<synchronous>, transform_indices = @transform_2, window_bounds = array<i64: 1, 96>}, {transform_indices = @transform_3, window_bounds = array<i64: 1, 8, 32>}, {transform_indices = @transform_4, window_bounds = array<i64: 1, 8, 32>}, {transform_indices = @transform_5, window_bounds = array<i64: 1, 8, 32>}]} {
    %c0 = arith.constant 0 : index
    %c0_0 = arith.constant 0 : index
    %c0_1 = arith.constant 0 : index
    %0 = vector.load %arg2[%c0, %c0_0, %c0_1] : memref<1x8x32xbf16, #tpu.memory_space<vmem>>, vector<1x8x32xbf16>
    %1 = vector.shape_cast %0 : vector<1x8x32xbf16> to vector<8x32xbf16>
    %c0_2 = arith.constant 0 : index
    %c0_3 = arith.constant 0 : index
    %2 = vector.load %arg3[%c0_2, %c0_3] : memref<32x96xbf16, #tpu.memory_space<vmem>>, vector<32x96xbf16>
    %cst = arith.constant dense<0.000000e+00> : vector<8x96xf32>
    %3 = tpu.matmul %1, %2, %cst {dimension_numbers = #tpu.dot_dimension_numbers<[1], [0], [0], [1], [0, 0, 1, 1], [], []>} : vector<8x32xbf16>, vector<32x96xbf16>, vector<8x96xf32> -> vector<8x96xf32>
    %c0_4 = arith.constant 0 : index
    %c0_5 = arith.constant 0 : index
    %4 = vector.load %arg4[%c0_4, %c0_5] : memref<1x96xf32, #tpu.memory_space<vmem>>, vector<1x96xf32>
    %5 = vector.broadcast %4 : vector<1x96xf32> to vector<8x96xf32>
    %6 = arith.addf %3, %5 : vector<8x96xf32>
    %7 = vector.extract_strided_slice %6 {offsets = [0, 0], sizes = [8, 32], strides = [1, 1]} : vector<8x96xf32> to vector<8x32xf32>
    %8 = arith.truncf %7 : vector<8x32xf32> to vector<8x32xbf16>
    %c0_6 = arith.constant 0 : index
    %c0_7 = arith.constant 0 : index
    %c0_8 = arith.constant 0 : index
    %9 = vector.load %arg5[%c0_6, %c0_7, %c0_8] : memref<1x8x32xbf16, #tpu.memory_space<vmem>>, vector<1x8x32xbf16>
    %10 = vector.shape_cast %9 : vector<1x8x32xbf16> to vector<8x32xbf16>
    %11 = vector.shape_cast %8 : vector<8x32xbf16> to vector<1x8x32xbf16>
    tpu.vector_store %arg5[%c0_6, %c0_7, %c0_8], %11 {strides = array<i32>} : memref<1x8x32xbf16, #tpu.memory_space<vmem>>, vector<1x8x32xbf16>,
    %12 = vector.extract_strided_slice %6 {offsets = [0, 32], sizes = [8, 32], strides = [1, 1]} : vector<8x96xf32> to vector<8x32xf32>
    %13 = arith.truncf %12 : vector<8x32xf32> to vector<8x32xbf16>
    %c0_9 = arith.constant 0 : index
    %c0_10 = arith.constant 0 : index
    %c0_11 = arith.constant 0 : index
    %14 = vector.load %arg6[%c0_9, %c0_10, %c0_11] : memref<1x8x32xbf16, #tpu.memory_space<vmem>>, vector<1x8x32xbf16>
    %15 = vector.shape_cast %14 : vector<1x8x32xbf16> to vector<8x32xbf16>
    %16 = vector.shape_cast %13 : vector<8x32xbf16> to vector<1x8x32xbf16>
    tpu.vector_store %arg6[%c0_9, %c0_10, %c0_11], %16 {strides = array<i32>} : memref<1x8x32xbf16, #tpu.memory_space<vmem>>, vector<1x8x32xbf16>,
    %17 = vector.extract_strided_slice %6 {offsets = [0, 64], sizes = [8, 32], strides = [1, 1]} : vector<8x96xf32> to vector<8x32xf32>
    %18 = arith.truncf %17 : vector<8x32xf32> to vector<8x32xbf16>
    %c0_12 = arith.constant 0 : index
    %c0_13 = arith.constant 0 : index
    %c0_14 = arith.constant 0 : index
    %19 = vector.load %arg7[%c0_12, %c0_13, %c0_14] : memref<1x8x32xbf16, #tpu.memory_space<vmem>>, vector<1x8x32xbf16>
    %20 = vector.shape_cast %19 : vector<1x8x32xbf16> to vector<8x32xbf16>
    %21 = vector.shape_cast %18 : vector<8x32xbf16> to vector<1x8x32xbf16>
    tpu.vector_store %arg7[%c0_12, %c0_13, %c0_14], %21 {strides = array<i32>} : memref<1x8x32xbf16, #tpu.memory_space<vmem>>, vector<1x8x32xbf16>,
    return
  }
  func.func @transform_0(%arg0: i32, %arg1: i32) -> (i32, i32, i32) {
    %c0_i32 = arith.constant 0 : i32
    %c0_i32_0 = arith.constant 0 : i32
    return %arg0, %arg1, %c0_i32 : i32, i32, i32
  }
  func.func @transform_1(%arg0: i32, %arg1: i32) -> (i32, i32) {
    %c0_i32 = arith.constant 0 : i32
    %c0_i32_0 = arith.constant 0 : i32
    %c0_i32_1 = arith.constant 0 : i32
    return %c0_i32, %c0_i32_0 : i32, i32
  }
  func.func @transform_2(%arg0: i32, %arg1: i32) -> (i32, i32) {
    %c0_i32 = arith.constant 0 : i32
    %c0_i32_0 = arith.constant 0 : i32
    %c0_i32_1 = arith.constant 0 : i32
    return %c0_i32, %c0_i32_0 : i32, i32
  }
  func.func @transform_3(%arg0: i32, %arg1: i32) -> (i32, i32, i32) {
    %c0_i32 = arith.constant 0 : i32
    %c0_i32_0 = arith.constant 0 : i32
    return %arg0, %arg1, %c0_i32 : i32, i32, i32
  }
  func.func @transform_4(%arg0: i32, %arg1: i32) -> (i32, i32, i32) {
    %c0_i32 = arith.constant 0 : i32
    %c0_i32_0 = arith.constant 0 : i32
    return %arg0, %arg1, %c0_i32 : i32, i32, i32
  }
  func.func @transform_5(%arg0: i32, %arg1: i32) -> (i32, i32, i32) {
    %c0_i32 = arith.constant 0 : i32
    %c0_i32_0 = arith.constant 0 : i32
    return %arg0, %arg1, %c0_i32 : i32, i32, i32
  }
}

</mosaic_0001>

<llo_original>
// kernel: tpu_custom_call.1
$region0: #{tpu_custom_call.1}
  #allocation0 [shape = 'u32[]', space=smem, size = 0x4, offset = 0x4, fixed_abs, tag = 'smem constant byte address 0x4 - core index']
  #allocation1 [shape = 'u32[144,128]{1,0:T(1,128)}', space=vmem, size = 0x12000, scoped, tag = 'internal scratch']
  %s0 = inlined_call_operand.hbm [shape: bf16[2,8,32], index: 0, kind: input, shape index: {}]
  %s1 = inlined_call_operand.hbm [shape: bf16[32,96], index: 1, kind: input, shape index: {}]
  %s2 = inlined_call_operand.vmem [shape: f32[1,96], index: 2, kind: input, shape index: {}]
  %s3 = inlined_call_operand.hbm [shape: bf16[2,8,32], index: 3, kind: output, shape index: {0}]
  %s4 = inlined_call_operand.hbm [shape: bf16[2,8,32], index: 4, kind: output, shape index: {1}]
  %s5 = inlined_call_operand.hbm [shape: bf16[2,8,32], index: 5, kind: output, shape index: {2}]
  %6 = xla_tuple %s3, %s4, %s5
  %s7 = sld [smem:[#allocation0]]
  $region69: #{tpu_custom_call.1} parent=0
    _
  %s9 = ssub.s32 1, %s7
  %s10 = scalar_select 0, %s9, %s7
  $region1: #{tpu_custom_call.1} parent=0
    #allocation2 [shape = 'u8[4096]{0}', space=vmem, size = 0x1000, scoped, tag = 'input window, operand 0']
    #allocation3 [shape = 's32[2]{0}', space=sflag, size = 0x8, scoped, tag = 'scoped memory for tpu_custom_call.1']
    #allocation4 [shape = 's32[2]{0}', space=sflag, size = 0x8, scoped, tag = 'scoped memory for tpu_custom_call.1']
    #allocation5 [shape = 'u8[8192]{0}', space=vmem, size = 0x2000, scoped, tag = 'input window, operand 1, single buffered']
    #allocation6 [shape = 's32[1]{0}', space=sflag, size = 0x4, scoped, tag = 'scoped memory for tpu_custom_call.1']
    #allocation7 [shape = 'u8[4096]{0}', space=vmem, size = 0x1000, scoped, tag = 'output window, operand 0']
    #allocation8 [shape = 'u8[4096]{0}', space=vmem, size = 0x1000, scoped, tag = 'output window, operand 1']
    #allocation9 [shape = 's32[2]{0}', space=sflag, size = 0x8, scoped, tag = 'scoped memory for tpu_custom_call.1']
    #allocation10 [shape = 'u8[4096]{0}', space=vmem, size = 0x1000, scoped, tag = 'output window, operand 2']
    %11 = vsyncpa [#allocation3], 0
    %s12 = scalar_lea.sflag [#allocation3], 1
    %13 = vsyncpa %s12, 0
    %14 = vsyncpa [#allocation6], 0
    %15 = vsyncpa [#allocation4], 0
    %s16 = scalar_lea.sflag [#allocation4], 1
    %17 = vsyncpa %s16, 0
    %18 = vsyncpa [#allocation9], 0
    %s19 = scalar_lea.sflag [#allocation9], 1
    %20 = vsyncpa %s19, 0
    loop: start=0, step=1, limit=4
    $region2: #{tpu_custom_call.1} parent=1 // loop_pre_header
      _
    $region3: #{tpu_custom_call.1} parent=1 // loop_header
      %s22 = sphi 0, %s26
      %p23 = scmp.ge.s32.totalorder %s22, 4
      %s29 = sphi 0, %s41
      %s30 = sphi 0, %s37
      %s31 = sphi 0, %s29
      %s32 = sphi 0, %s30
      %s33 = sphi 0, %s31
      %s34 = sphi 0, %s32
      %s46 = sphi 0, %s48
      %s49 = sphi 0, %s46
      %s50 = sphi 0, %s49
      %s66 = sphi 0, %s50
      %s70 = sphi 0, %s70
      %s72 = sphi 0, %s70
      %s73 = sphi 0, %s72
      %s87 = sphi 0, %s73
      %s91 = sphi 0, %s91
      %s93 = sphi 0, %s91
      %s94 = sphi 0, %s93
      %s108 = sphi 0, %s94
      %s116 = sphi 0, %s118
      %s119 = sphi 0, %s116
      %s120 = sphi 0, %s119
      %s136 = sphi 0, %s120
      %s144 = sphi 0, %s146
      %s147 = sphi 0, %s144
      %s148 = sphi 0, %s147
      %s164 = sphi 0, %s148
      %s172 = sphi 0, %s174
      %s175 = sphi 0, %s172
      %s176 = sphi 0, %s175
      %s192 = sphi 0, %s176
    $region4: #{tpu_custom_call.1} parent=1 // loop_header_branch
      %25 = sbr.rel (%p23) target = $region8
    $region5: #{tpu_custom_call.1} parent=1 // loop_body
      %s27 = ssub.s32 %s22, 1
      %s28 = ssub.s32 %s22, 2
      %s35 = sadd.s32 1, %s30
      %p36 = scmp.ge.s32.totalorder %s35, 1
      %s37 = scalar_select %p36, 0, %s35
      %s38 = sadd.s32 1, %s29
      %s39 = scalar_select %p36, %s38, %s29
      %p40 = scmp.ge.s32.totalorder %s39, 2
      %s41 = scalar_select %p40, 0, %s39
      %s42 = ssub.s32 %s29, %s41
      %s43 = ssub.s32 %s30, %s37
      %s44 = sor.u32 %s42, %s43
      %p45 = scmp.eq.s32.totalorder %s44, 0
      %s47 = sadd.s32 %s46, 1
      %s48 = scalar_select %p45, %s46, %s47
      %p51 = pneg %p45
      %p52 = scmp.eq.s32.totalorder %s22, 1
      %p53 = por %p51, %p52
      %p54 = scmp.ne.s32.totalorder %s46, %s49
      %p55 = scmp.eq.s32.totalorder %s22, 0
      %p56 = por %p54, %p55
      %p57 = scmp.ne.s32.totalorder %s46, %s49
      %p58 = scmp.eq.s32.totalorder %s27, 1
      %p59 = por %p57, %p58
      %p60 = scmp.ne.s32.totalorder %s49, %s50
      %p61 = scmp.eq.s32.totalorder %s27, 0
      %p62 = por %p60, %p61
      %p63 = scmp.ne.s32.totalorder %s49, %s50
      %p64 = scmp.eq.s32.totalorder %s28, 1
      %p65 = por %p63, %p64
      %p67 = scmp.ne.s32.totalorder %s50, %s66
      %p68 = scmp.eq.s32.totalorder %s28, 0
      %p69 = por %p67, %p68
      %s71 = sadd.s32 %s70, 1
      %p74 = scmp.eq.s32.totalorder %s22, 1
      %p75 = scmp.ne.s32.totalorder %s70, %s72
      %p76 = scmp.eq.s32.totalorder %s22, 0
      %p77 = por %p75, %p76
      %p78 = scmp.ne.s32.totalorder %s70, %s72
      %p79 = scmp.eq.s32.totalorder %s27, 1
      %p80 = por %p78, %p79
      %p81 = scmp.ne.s32.totalorder %s72, %s73
      %p82 = scmp.eq.s32.totalorder %s27, 0
      %p83 = por %p81, %p82
      %p84 = scmp.ne.s32.totalorder %s72, %s73
      %p85 = scmp.eq.s32.totalorder %s28, 1
      %p86 = por %p84, %p85
      %p88 = scmp.ne.s32.totalorder %s73, %s87
      %p89 = scmp.eq.s32.totalorder %s28, 0
      %p90 = por %p88, %p89
      %s92 = sadd.s32 %s91, 1
      %p95 = scmp.eq.s32.totalorder %s22, 1
      %p96 = scmp.ne.s32.totalorder %s91, %s93
      %p97 = scmp.eq.s32.totalorder %s22, 0
      %p98 = por %p96, %p97
      %p99 = scmp.ne.s32.totalorder %s91, %s93
      %p100 = scmp.eq.s32.totalorder %s27, 1
      %p101 = por %p99, %p100
      %p102 = scmp.ne.s32.totalorder %s93, %s94
      %p103 = scmp.eq.s32.totalorder %s27, 0
      %p104 = por %p102, %p103
      %p105 = scmp.ne.s32.totalorder %s93, %s94
      %p106 = scmp.eq.s32.totalorder %s28, 1
      %p107 = por %p105, %p106
      %p109 = scmp.ne.s32.totalorder %s94, %s108
      %p110 = scmp.eq.s32.totalorder %s28, 0
      %p111 = por %p109, %p110
      %s112 = ssub.s32 %s29, %s41
      %s113 = ssub.s32 %s30, %s37
      %s114 = sor.u32 %s112, %s113
      %p115 = scmp.eq.s32.totalorder %s114, 0
      %s117 = sadd.s32 %s116, 1
      %s118 = scalar_select %p115, %s116, %s117
      %p121 = pneg %p115
      %p122 = scmp.eq.s32.totalorder %s22, 1
      %p123 = por %p121, %p122
      %p124 = scmp.ne.s32.totalorder %s116, %s119
      %p125 = scmp.eq.s32.totalorder %s22, 0
      %p126 = por %p124, %p125
      %p127 = scmp.ne.s32.totalorder %s116, %s119
      %p128 = scmp.eq.s32.totalorder %s27, 1
      %p129 = por %p127, %p128
      %p130 = scmp.ne.s32.totalorder %s119, %s120
      %p131 = scmp.eq.s32.totalorder %s27, 0
      %p132 = por %p130, %p131
      %p133 = scmp.ne.s32.totalorder %s119, %s120
      %p134 = scmp.eq.s32.totalorder %s28, 1
      %p135 = por %p133, %p134
      %p137 = scmp.ne.s32.totalorder %s120, %s136
      %p138 = scmp.eq.s32.totalorder %s28, 0
      %p139 = por %p137, %p138
      %s140 = ssub.s32 %s29, %s41
      %s141 = ssub.s32 %s30, %s37
      %s142 = sor.u32 %s140, %s141
      %p143 = scmp.eq.s32.totalorder %s142, 0
      %s145 = sadd.s32 %s144, 1
      %s146 = scalar_select %p143, %s144, %s145
      %p149 = pneg %p143
      %p150 = scmp.eq.s32.totalorder %s22, 1
      %p151 = por %p149, %p150
      %p152 = scmp.ne.s32.totalorder %s144, %s147
      %p153 = scmp.eq.s32.totalorder %s22, 0
      %p154 = por %p152, %p153
      %p155 = scmp.ne.s32.totalorder %s144, %s147
      %p156 = scmp.eq.s32.totalorder %s27, 1
      %p157 = por %p155, %p156
      %p158 = scmp.ne.s32.totalorder %s147, %s148
      %p159 = scmp.eq.s32.totalorder %s27, 0
      %p160 = por %p158, %p159
      %p161 = scmp.ne.s32.totalorder %s147, %s148
      %p162 = scmp.eq.s32.totalorder %s28, 1
      %p163 = por %p161, %p162
      %p165 = scmp.ne.s32.totalorder %s148, %s164
      %p166 = scmp.eq.s32.totalorder %s28, 0
      %p167 = por %p165, %p166
      %s168 = ssub.s32 %s29, %s41
      %s169 = ssub.s32 %s30, %s37
      %s170 = sor.u32 %s168, %s169
      %p171 = scmp.eq.s32.totalorder %s170, 0
      %s173 = sadd.s32 %s172, 1
      %s174 = scalar_select %p171, %s172, %s173
      %p177 = pneg %p171
      %p178 = scmp.eq.s32.totalorder %s22, 1
      %p179 = por %p177, %p178
      %p180 = scmp.ne.s32.totalorder %s172, %s175
      %p181 = scmp.eq.s32.totalorder %s22, 0
      %p182 = por %p180, %p181
      %p183 = scmp.ne.s32.totalorder %s172, %s175
      %p184 = scmp.eq.s32.totalorder %s27, 1
      %p185 = por %p183, %p184
      %p186 = scmp.ne.s32.totalorder %s175, %s176
      %p187 = scmp.eq.s32.totalorder %s27, 0
      %p188 = por %p186, %p187
      %p189 = scmp.ne.s32.totalorder %s175, %s176
      %p190 = scmp.eq.s32.totalorder %s28, 1
      %p191 = por %p189, %p190
      %p193 = scmp.ne.s32.totalorder %s176, %s192
      %p194 = scmp.eq.s32.totalorder %s28, 0
      %p195 = por %p193, %p194
      %p196 = scmp.le.s32.totalorder 1, %s22
      %p197 = scmp.lt.s32.totalorder %s22, 3
      %p198 = pnand %p196, %p197
      %p199 = pneg %p198
      // Predicated region
      $region9: #{tpu_custom_call.1} parent=5 // pred_check
        _
      $region10: #{tpu_custom_call.1} parent=5 // pred_check_branch
        %201 = sbr.rel (%p198) target = $region12
      $region11: #{tpu_custom_call.1} parent=5 // pred_region
        %s202 = ssub.s32 %s22, 1
        // Predicated region
        $region13: #{tpu_custom_call.1} parent=11 // pred_check
          %p203 = pneg %p83
        $region14: #{tpu_custom_call.1} parent=11 // pred_check_branch
          %205 = sbr.rel (%p203) target = $region16
        $region15: #{tpu_custom_call.1} parent=11 // pred_region
          %s207 = ssub.s32 256, 256
          %208 = vsyncadd [#allocation6], %s207
          %s209 = sshll.u32 [#allocation5], 4
          %s210 = int_to_ptr.vmem [resolvable:$true] %s209
          %215 = dma.hbm_to_vmem [thread:$0]  %s1, 256, %s210, [#allocation6], 64, 64, 4
        $region16: #{tpu_custom_call.1} parent=11 // pred_fallthru
          _
        // Predicated region
        $region17: #{tpu_custom_call.1} parent=11 // pred_check
          %p216 = pneg %p104
        $region18: #{tpu_custom_call.1} parent=11 // pred_check_branch
          %218 = sbr.rel (%p216) target = $region20
        $region19: #{tpu_custom_call.1} parent=11 // pred_region
          _
        $region20: #{tpu_custom_call.1} parent=11 // pred_fallthru
          _
      $region12: #{tpu_custom_call.1} parent=5 // pred_fallthru
        _
      %p219 = scmp.lt.s32.totalorder %s22, 2
      // Predicated region
      $region21: #{tpu_custom_call.1} parent=5 // pred_check
        %p220 = pneg %p219
      $region22: #{tpu_custom_call.1} parent=5 // pred_check_branch
        %222 = sbr.rel (%p220) target = $region24
      $region23: #{tpu_custom_call.1} parent=5 // pred_region
        // Predicated region
        $region25: #{tpu_custom_call.1} parent=23 // pred_check
          %p223 = pneg %p56
        $region26: #{tpu_custom_call.1} parent=23 // pred_check_branch
          %225 = sbr.rel (%p223) target = $region28
        $region27: #{tpu_custom_call.1} parent=23 // pred_region
          %s226 = sand.u32 %s46, 1
          %s227 = scalar_lea.sflag [#allocation3], %s226
          %s228 = sand.u32 %s46, 1
          %s229 = smul.addr %s228, 4
          %s230 = scalar_lea.vmem [#allocation2], %s229
          %s232 = ssub.s32 64, 64
          %233 = vsyncadd %s227, %s232
          %s234 = sadd.s32 %s30, %s29
          %s235 = smul.addr %s234, 64
          %s236 = scalar_lea.hbm %s0, %s235
          %s238 = sshll.u32 %s230, 4
          %s239 = int_to_ptr.vmem [resolvable:$true] %s238
          %241 = dma.hbm_to_vmem [thread:$0]  %s236, 64, %s239, %s227
        $region28: #{tpu_custom_call.1} parent=23 // pred_fallthru
          _
      $region24: #{tpu_custom_call.1} parent=5 // pred_fallthru
        _
      %p242 = scmp.le.s32.totalorder 1, %s22
      %p243 = scmp.lt.s32.totalorder %s22, 3
      %p244 = pnand %p242, %p243
      %p245 = pneg %p244
      // Predicated region
      $region29: #{tpu_custom_call.1} parent=5 // pred_check
        _
      $region30: #{tpu_custom_call.1} parent=5 // pred_check_branch
        %247 = sbr.rel (%p244) target = $region32
      $region31: #{tpu_custom_call.1} parent=5 // pred_region
        %s248 = ssub.s32 %s22, 1
        %s249 = sand.u32 %s49, 1
        %s250 = scalar_lea.sflag [#allocation3], %s249
        %s251 = sand.u32 %s49, 1
        %s252 = smul.addr %s251, 4
        %s253 = scalar_lea.vmem [#allocation2], %s252
        // Predicated region
        $region33: #{tpu_custom_call.1} parent=31 // pred_check
          %p254 = pneg %p62
        $region34: #{tpu_custom_call.1} parent=31 // pred_check_branch
          %256 = sbr.rel (%p254) target = $region36
        $region35: #{tpu_custom_call.1} parent=31 // pred_region
          %257 = dma.done %s250, 64
        $region36: #{tpu_custom_call.1} parent=31 // pred_fallthru
          _
        // Predicated region
        $region37: #{tpu_custom_call.1} parent=31 // pred_check
          %p258 = pneg %p83
        $region38: #{tpu_custom_call.1} parent=31 // pred_check_branch
          %260 = sbr.rel (%p258) target = $region40
        $region39: #{tpu_custom_call.1} parent=31 // pred_region
          %261 = dma.done [#allocation6], 256
        $region40: #{tpu_custom_call.1} parent=31 // pred_fallthru
          _
        %s262 = sand.u32 %s49, 1
        %s263 = scalar_lea.sflag [#allocation3], %s262
        %s264 = sand.u32 %s49, 1
        %s265 = smul.addr %s264, 4
        %s266 = scalar_lea.vmem [#allocation2], %s265
        %p267 = pneg %p62
        %p268 = pneg %p59
        %p269 = pneg %p83
        %p270 = pneg %p80
        %p271 = pneg %p104
        %p272 = pneg %p101
        %p273 = pneg %p132
        %p274 = pneg %p129
        %s275 = sand.u32 %s119, 1
        %s276 = scalar_lea.sflag [#allocation4], %s275
        %s277 = sand.u32 %s119, 1
        %s278 = smul.addr %s277, 4
        %s279 = scalar_lea.vmem [#allocation7], %s278
        %p280 = pneg %p160
        %p281 = pneg %p157
        %s282 = sand.u32 %s27, 1
        %s283 = scalar_lea.sflag [#allocation9], %s282
        %s284 = sand.u32 %s147, 1
        %s285 = smul.addr %s284, 4
        %s286 = scalar_lea.vmem [#allocation8], %s285
        %p287 = pneg %p188
        %p288 = pneg %p185
        %s289 = sand.u32 %s27, 1
        %s290 = scalar_lea.sflag [#allocation9], %s289
        %s291 = sand.u32 %s175, 1
        %s292 = smul.addr %s291, 4
        %s293 = scalar_lea.vmem [#allocation10], %s292
        %v295 = vld [vmem:[%s253] sm:$0xf]
        %v296 = vld [vmem:[#allocation5] sm:$0xf]
        %v297 = vld [vmem:[#allocation5 + $0x4] sm:$0xf]
        %v298 = vld [vmem:[#allocation5 + $0x8] sm:$0xf]
        %v299 = vld [vmem:[#allocation5 + $0xc] sm:$0xf]
        %v300 = vld [vmem:[%s2] sm:$0x1]
        %v302 = vlaneseq
        %v303 = vshrl.u32 %v302, 7
        %v304 = vsub.s32 0, %v303
        %v305 = vrot.slane %v300, %v304
        %v311 = vunpack.c.l.b16 %v296
        %v312 = vunpack.c.l.b16 %v297
        %v313 = vunpack.c.l.b16 %v298
        %v314 = vunpack.c.l.b16 %v299
        %v315 = vpack.c.b16 %v312, %v311
        %v316 = vpack.c.b16 %v314, %v313
        %vm319 = vcmask 261120
        %v321 = vsel %vm319, %v295, 0
        %323 = vmatprep.subr.bf16.mxu0 0
        %324 = vmatpush1.bf16.msra.mxu0 0
        %325 = vmatprep.subr.bf16.mxu0 0
        %326 = vmatpush1.bf16.msra.mxu0 0
        %327 = vmatprep.subr.bf16.mxu0 0
        %328 = vmatpush1.bf16.msra.mxu0 0
        %329 = vmatprep.subr.bf16.mxu0 0
        %330 = vmatpush1.bf16.msra.mxu0 0
        %331 = vmatprep.subr.bf16.mxu0 0
        %332 = vmatpush1.bf16.msra.mxu0 0
        %333 = vmatprep.subr.bf16.mxu0 0
        %334 = vmatpush1.bf16.msra.mxu0 0
        %335 = vmatprep.subr.bf16.mxu0 0
        %336 = vmatpush1.bf16.msra.mxu0 %v316
        %337 = vmatprep.subr.bf16.mxu0 0
        %338 = vmatpush1.bf16.msra.mxu0 %v315
        %339 = vmatprep.subr.bf16.mxu0 0
        %340 = vmatpush2.bf16.msra.mxu0 0
        %341 = vmatprep.subr.bf16.mxu0 0
        %342 = vmatpush2.bf16.msra.mxu0 0
        %343 = vmatprep.subr.bf16.mxu0 0
        %344 = vmatpush2.bf16.msra.mxu0 0
        %345 = vmatprep.subr.bf16.mxu0 0
        %346 = vmatpush2.bf16.msra.mxu0 0
        %347 = vmatprep.subr.bf16.mxu0 0
        %348 = vmatpush2.bf16.msra.mxu0 0
        %349 = vmatprep.subr.bf16.mxu0 0
        %350 = vmatpush2.bf16.msra.mxu0 0
        %351 = vmatprep.subr.bf16.mxu0 0
        %352 = vmatpush2.bf16.msra.mxu0 0
        %353 = vmatprep.subr.bf16.mxu0 0
        %354 = vmatpush2.bf16.msra.mxu0 0
        %355 = vmatprep.mubr.bf16.mxu0 0
        %356 = vmatmul.mubr.bf16.gmra.mxu0 %v321
        %v357 = vpop.f32.mrf.mxu0
        %v358 = vadd.f32 %v305, %v357
        %v359 = vpop.f32.mrf.mxu0
        %v360 = vpop.f32.mrf.mxu0
        %v361 = vpop.f32.mrf.mxu0
        %362 = vdwg.mxu0
        %v363 = vpack.c.bf16 %v358, %v358
        %vm364 = vcmask 257024
        %365 = vst.msk [vmem:[%s279] sm:$0xf] %vm364, %v363
        %v367 = vunpack.c.l.b16 %v363
        %v368 = vpack.c.b16 %v367, %v367
        %369 = vrot.lane.b32.xlu0 %v368, 96
        %v370 = vpop.permute.xlu0 %369
        %372 = vst.msk [vmem:[%s286] sm:$0xf] %vm364, %v370
        %373 = vrot.lane.b32.xlu0 %v368, 64
        %v374 = vpop.permute.xlu0 %373
        %376 = vst.msk [vmem:[%s293] sm:$0xf] %vm364, %v374
        %s377 = sand.u32 %s119, 1
        %s378 = scalar_lea.sflag [#allocation4], %s377
        %s379 = sand.u32 %s119, 1
        %s380 = smul.addr %s379, 4
        %s381 = scalar_lea.vmem [#allocation7], %s380
        %s382 = sand.u32 %s27, 1
        %s383 = scalar_lea.sflag [#allocation9], %s382
        %s384 = sand.u32 %s147, 1
        %s385 = smul.addr %s384, 4
        %s386 = scalar_lea.vmem [#allocation8], %s385
        %s387 = sand.u32 %s27, 1
        %s388 = scalar_lea.sflag [#allocation9], %s387
        %s389 = sand.u32 %s175, 1
        %s390 = smul.addr %s389, 4
        %s391 = scalar_lea.vmem [#allocation10], %s390
        // Predicated region
        $region41: #{tpu_custom_call.1} parent=31 // pred_check
          %p392 = pneg %p129
        $region42: #{tpu_custom_call.1} parent=31 // pred_check_branch
          %394 = sbr.rel (%p392) target = $region44
        $region43: #{tpu_custom_call.1} parent=31 // pred_region
          %s396 = ssub.s32 64, 64
          %397 = vsyncadd %s378, %s396
          %s398 = sadd.s32 %s32, %s31
          %s399 = smul.addr %s398, 64
          %s400 = scalar_lea.hbm %s3, %s399
          %s402 = sshll.u32 %s381, 4
          %s403 = int_to_ptr.vmem [resolvable:$true] %s402
          %405 = dma.vmem_to_hbm [thread:$0]  %s403, 64, %s400, %s378
        $region44: #{tpu_custom_call.1} parent=31 // pred_fallthru
          _
        // Predicated region
        $region45: #{tpu_custom_call.1} parent=31 // pred_check
          %p406 = pneg %p157
        $region46: #{tpu_custom_call.1} parent=31 // pred_check_branch
          %408 = sbr.rel (%p406) target = $region48
        $region47: #{tpu_custom_call.1} parent=31 // pred_region
          %s410 = ssub.s32 64, 64
          %411 = vsyncadd %s383, %s410
          %s412 = sadd.s32 %s32, %s31
          %s413 = smul.addr %s412, 64
          %s414 = scalar_lea.hbm %s4, %s413
          %s416 = sshll.u32 %s386, 4
          %s417 = int_to_ptr.vmem [resolvable:$true] %s416
          %419 = dma.vmem_to_hbm [thread:$0]  %s417, 64, %s414, %s383
        $region48: #{tpu_custom_call.1} parent=31 // pred_fallthru
          _
        // Predicated region
        $region49: #{tpu_custom_call.1} parent=31 // pred_check
          %p420 = pneg %p185
        $region50: #{tpu_custom_call.1} parent=31 // pred_check_branch
          %422 = sbr.rel (%p420) target = $region52
        $region51: #{tpu_custom_call.1} parent=31 // pred_region
          %s424 = ssub.s32 64, 64
          %425 = vsyncadd %s388, %s424
          %s426 = sadd.s32 %s32, %s31
          %s427 = smul.addr %s426, 64
          %s428 = scalar_lea.hbm %s5, %s427
          %s430 = sshll.u32 %s391, 4
          %s431 = int_to_ptr.vmem [resolvable:$true] %s430
          %433 = dma.vmem_to_hbm [thread:$0]  %s431, 64, %s428, %s388
        $region52: #{tpu_custom_call.1} parent=31 // pred_fallthru
          _
      $region32: #{tpu_custom_call.1} parent=5 // pred_fallthru
        _
      %p434 = scmp.le.s32.totalorder 2, %s22
      // Predicated region
      $region53: #{tpu_custom_call.1} parent=5 // pred_check
        %p435 = pneg %p434
      $region54: #{tpu_custom_call.1} parent=5 // pred_check_branch
        %437 = sbr.rel (%p435) target = $region56
      $region55: #{tpu_custom_call.1} parent=5 // pred_region
        %s438 = ssub.s32 %s22, 2
        // Predicated region
        $region57: #{tpu_custom_call.1} parent=55 // pred_check
          %p439 = pneg %p135
        $region58: #{tpu_custom_call.1} parent=55 // pred_check_branch
          %441 = sbr.rel (%p439) target = $region60
        $region59: #{tpu_custom_call.1} parent=55 // pred_region
          %s442 = sand.u32 %s120, 1
          %s443 = scalar_lea.sflag [#allocation4], %s442
          %s444 = sand.u32 %s120, 1
          %s445 = smul.addr %s444, 4
          %s446 = scalar_lea.vmem [#allocation7], %s445
          %447 = dma.done %s443, 64
        $region60: #{tpu_custom_call.1} parent=55 // pred_fallthru
          _
        // Predicated region
        $region61: #{tpu_custom_call.1} parent=55 // pred_check
          %p448 = pneg %p163
        $region62: #{tpu_custom_call.1} parent=55 // pred_check_branch
          %450 = sbr.rel (%p448) target = $region64
        $region63: #{tpu_custom_call.1} parent=55 // pred_region
          %s451 = sand.u32 %s28, 1
          %s452 = scalar_lea.sflag [#allocation9], %s451
          %s453 = sand.u32 %s148, 1
          %s454 = smul.addr %s453, 4
          %s455 = scalar_lea.vmem [#allocation8], %s454
          %456 = dma.done %s452, 64
        $region64: #{tpu_custom_call.1} parent=55 // pred_fallthru
          _
        // Predicated region
        $region65: #{tpu_custom_call.1} parent=55 // pred_check
          %p457 = pneg %p191
        $region66: #{tpu_custom_call.1} parent=55 // pred_check_branch
          %459 = sbr.rel (%p457) target = $region68
        $region67: #{tpu_custom_call.1} parent=55 // pred_region
          %s460 = sand.u32 %s28, 1
          %s461 = scalar_lea.sflag [#allocation9], %s460
          %s462 = sand.u32 %s176, 1
          %s463 = smul.addr %s462, 4
          %s464 = scalar_lea.vmem [#allocation10], %s463
          %465 = dma.done %s461, 64
        $region68: #{tpu_custom_call.1} parent=55 // pred_fallthru
          _
      $region56: #{tpu_custom_call.1} parent=5 // pred_fallthru
        _
    $region6: #{tpu_custom_call.1} parent=1 // loop_footer
      %s26 = sadd.s32 1, %s22
    $region7: #{tpu_custom_call.1} parent=1 // loop_footer_branch
      %21 = sbr.rel target = $region3
    $region8: #{tpu_custom_call.1} parent=1 // loop_exit
      _
    %466 = vsyncpa [#allocation3], 1
    %s467 = scalar_lea.sflag [#allocation3], 1
    %468 = vsyncpa %s467, 1
    %469 = vsyncpa [#allocation6], 1
    %470 = vsyncpa [#allocation4], 1
    %s471 = scalar_lea.sflag [#allocation4], 1
    %472 = vsyncpa %s471, 1
    %473 = vsyncpa [#allocation9], 1
    %s474 = scalar_lea.sflag [#allocation9], 1
    %475 = vsyncpa %s474, 1

</llo_original>
